<compile_context>
chip_gen: v7x
topology: tpu7x:2x2x1
jax: 0.10.0
libtpu: 0.0.40
codegen_flags: <defaults>
</compile_context>

<pallas_src>
import functools

import jax
import jax.numpy as jnp
from jax.experimental import pallas as pl
from jax.experimental.pallas import tpu as pltpu


def _gn_gram_kernel(jt_ref, e_ref, jtj_ref, jte_ref, *, m_total, b_total,
                    need_mask):
    # jt_ref: (tb, 6, tm) block of J^T ; e_ref: (tb, 1, tm) block of e.
    # jtj_ref (tb,6,6) / jte_ref (tb,6,1): resident accumulators across the
    # M (reduction) grid axis.
    b = pl.program_id(0)
    k = pl.program_id(1)

    @pl.when(k == 0)
    def _():
        jtj_ref[...] = jnp.zeros_like(jtj_ref)
        jte_ref[...] = jnp.zeros_like(jte_ref)

    jt = jt_ref[...]                                     # (tb, 6, tm)
    e = e_ref[...]                                       # (tb, 1, tm)

    if need_mask:
        # Ragged tails: Pallas does not zero partially out-of-bounds input
        # blocks, so select garbage lanes/rows to 0 (select, not multiply --
        # garbage may be NaN).
        tb, _, tm = jt_ref.shape
        lane = jax.lax.broadcasted_iota(jnp.int32, (1, 1, tm), 2)
        row = jax.lax.broadcasted_iota(jnp.int32, (tb, 1, 1), 0)
        mask = jnp.logical_and(k * tm + lane < m_total,
                               b * tb + row < b_total)   # (tb, 1, tm)
        jt = jnp.where(mask, jt, 0.0)
        e = jnp.where(mask, e, 0.0)

    # J^T J partial: batched over tb, contracting the lane (M) axis on the MXU.
    jtj_ref[...] += jax.lax.dot_general(
        jt, jt,
        dimension_numbers=(((2,), (2,)), ((0,), (0,))),
        preferred_element_type=jnp.float32)              # (tb, 6, 6)

    # J^T e partial on VPU/XLU (avoids a second set of MXU weight pushes).
    jte_ref[...] += jnp.sum(jt * e, axis=-1, keepdims=True)   # (tb, 6, 1)


def _gram_pallas(jt, e_row, *, tb, tm, bs, m):
    assert tm == m or tm % 128 == 0, "tm must equal M or be a multiple of 128"
    grid_b = pl.cdiv(bs, tb)
    grid_m = pl.cdiv(m, tm)
    need_mask = (bs % tb != 0) or (m % tm != 0)
    bp = grid_b * tb  # outputs sized to whole blocks; sliced back to bs below

    kernel = functools.partial(_gn_gram_kernel, m_total=m, b_total=bs,
                               need_mask=need_mask)
    jtj, jte = pl.pallas_call(
        kernel,
        out_shape=(jax.ShapeDtypeStruct((bp, 6, 6), jnp.float32),
                   jax.ShapeDtypeStruct((bp, 6, 1), jnp.float32)),
        grid_spec=pltpu.PrefetchScalarGridSpec(
            num_scalar_prefetch=0,
            grid=(grid_b, grid_m),
            in_specs=[pl.BlockSpec((tb, 6, tm), lambda b, k: (b, 0, k)),
                      pl.BlockSpec((tb, 1, tm), lambda b, k: (b, 0, k))],
            out_specs=[pl.BlockSpec((tb, 6, 6), lambda b, k: (b, 0, 0)),
                       pl.BlockSpec((tb, 6, 1), lambda b, k: (b, 0, 0))],
        ),
        compiler_params=pltpu.CompilerParams(
            dimension_semantics=("parallel", "arbitrary"),
            vmem_limit_bytes=32 * 1024 * 1024),
    )(jt, e_row)
    return jtj[:bs], jte[:bs]


def _pick_tiles(bs, m):
    # >=2 batch blocks whenever bs >= 2 (v7x dual TensorCore), <=16 rows/block.
    tb = max(1, min(16, pl.cdiv(bs, 2)))
    # ~8 MiB of f32 payload per grid step (7 rows of length tm per batch row),
    # i.e. <=16 MiB double-buffered -- safe under the 32 MiB VMEM limit on
    # v5e/v6e/v7x while amortizing the per-grid-step overhead.
    step_budget = 8 * 1024 * 1024
    tm = step_budget // (28 * tb)
    if m <= tm:
        tm = m                                 # single M block, no ragged tail
    else:
        tm = max(512, (tm // 512) * 512)       # keep the block (8,128)-aligned
    return tb, tm


def gn_layer_forward(x, e, J, params, *, tb=None, tm=None):
    w1, b1, w2, b2, w3, b3 = params
    bs, n, c = e.shape
    m = n * c
    x = x.astype(jnp.float32)
    e = e.astype(jnp.float32)

    # lambda-MLP hoisted out of the kernel: one batched (B,C)@(C,16) chain.
    e_mean = jnp.mean(e, axis=1)                                    # (B, C)
    h = jax.nn.relu(e_mean @ w1 + b1)
    h = jax.nn.relu(h @ w2 + b2)
    lam = jax.nn.relu(h @ w3 + b3)                                  # (B, 1)

    # TODO(synk): this swapaxes is the last remaining wrapper-side HBM pass
    # over J; fuse it into J's producer (emit (B,6,M) directly) if possible.
    Jt = jnp.swapaxes(J.reshape(bs, m, 6).astype(jnp.float32), 1, 2)  # (B,6,M)
    e_row = e.reshape(bs, 1, m)                                       # (B,1,M)

    tb_def, tm_def = _pick_tiles(bs, m)
    tb = tb_def if tb is None else tb
    tm = tm_def if tm is None else tm

    jtj, jte = _gram_pallas(Jt, e_row, tb=tb, tm=tm, bs=bs, m=m)

    jtj = jtj + lam[:, :, None] * jnp.eye(6, dtype=jnp.float32)
    delta_x = jnp.linalg.solve(jtj, jte)[:, :, 0]
    # TODO(synk): PyTorch wraps torch.linalg.solve in try/except RuntimeError
    # and skips the whole update if the batched system is singular; JAX has no
    # exception path, so approximate it with an all-finite guard on delta_x.
    ok = jnp.all(jnp.isfinite(delta_x))
    return jnp.where(ok, x + delta_x, x)


def init_params(out_channels, key):
    """Deterministic init mimicking nn.Linear's default uniform(-1/sqrt(fan_in))."""
    ks = jax.random.split(key, 6)

    def lin(kw, kb, fan_in, fan_out):
        bound = 1.0 / float(fan_in) ** 0.5
        w = jax.random.uniform(kw, (fan_in, fan_out), jnp.float32, -bound, bound)
        b = jax.random.uniform(kb, (1, fan_out), jnp.float32, -bound, bound)
        return w, b

    w1, b1 = lin(ks[0], ks[1], out_channels, 16)
    w2, b2 = lin(ks[2], ks[3], 16, 16)
    w3, b3 = lin(ks[4], ks[5], 16, 1)
    return (w1, b1, w2, b2, w3, b3)


def reference_forward(x, e, J, params):
    """Pure-JAX reference of GNLayer.forward for correctness checking."""
    w1, b1, w2, b2, w3, b3 = params
    bs = x.shape[0]
    e_mean = e.mean(axis=1)                                 # (B, C)
    h = jax.nn.relu(e_mean @ w1 + b1)
    h = jax.nn.relu(h @ w2 + b2)
    lam = jax.nn.relu(h @ w3 + b3)                          # (B, 1)
    Jr = J.reshape(bs, -1, 6)
    er = e.reshape(bs, -1)
    JtJ = jnp.einsum('bmi,bmj->bij', Jr, Jr) + lam[:, :, None] * jnp.eye(6)
    Jte = jnp.einsum('bmi,bm->bi', Jr, er)
    delta = jnp.linalg.solve(JtJ, Jte[..., None])[:, :, 0]
    return x + delta


if __name__ == "__main__":
    key = jax.random.PRNGKey(0)
    bs, n_pts, out_ch = 2, 16, 4
    k1, k2, k3, kp = jax.random.split(key, 4)

    x = jax.random.normal(k1, (bs, 6), jnp.float32)
    e = jax.random.normal(k2, (bs, n_pts, out_ch), jnp.float32)
    J = jax.random.normal(k3, (bs, n_pts, out_ch, 6), jnp.float32)
    params = init_params(out_ch, kp)

    out = jax.block_until_ready(gn_layer_forward(x, e, J, params))
    ref = jax.block_until_ready(reference_forward(x, e, J, params))
    assert jnp.allclose(out, ref, rtol=1e-3, atol=1e-3), (out, ref)

    # Ragged-tile path: non-dividing batch (3 % 2 != 0) and M (160 % 128 != 0)
    # exercise the in-kernel masks that replaced the old jnp.pad HBM copy.
    bs2, n2 = 3, 40
    j1, j2, j3 = jax.random.split(jax.random.PRNGKey(1), 3)
    x2 = jax.random.normal(j1, (bs2, 6), jnp.float32)
    e2 = jax.random.normal(j2, (bs2, n2, out_ch), jnp.float32)
    J2 = jax.random.normal(j3, (bs2, n2, out_ch, 6), jnp.float32)
    out2 = jax.block_until_ready(gn_layer_forward(x2, e2, J2, params, tb=2, tm=128))
    ref2 = jax.block_until_ready(reference_forward(x2, e2, J2, params))
    assert jnp.allclose(out2, ref2, rtol=1e-3, atol=1e-3), (out2, ref2)

    print("KERNEL_OK")
</pallas_src>

<mosaic_0001>
module attributes {stable_mosaic.version = 11 : i64} {
  func.func @_gn_gram_kernel(%arg0: i32, %arg1: i32, %arg2: memref<1x6x64xf32, #tpu.memory_space<vmem>>, %arg3: memref<1x1x64xf32, #tpu.memory_space<vmem>>, %arg4: memref<1x6x6xf32, #tpu.memory_space<vmem>>, %arg5: memref<1x6x1xf32, #tpu.memory_space<vmem>>) attributes {dimension_semantics = [#tpu.dimension_semantics<parallel>, #tpu.dimension_semantics<arbitrary>], iteration_bounds = array<i64: 2, 1>, scalar_prefetch = 0 : i64, scratch_operands = 0 : i64, tpu.core_type = #tpu.core_type<tc>, window_params = [{transform_indices = @transform_0, window_bounds = array<i64: 1, 6, 64>}, {transform_indices = @transform_1, window_bounds = array<i64: 1, 1, 64>}, {transform_indices = @transform_2, window_bounds = array<i64: 1, 6, 6>}, {transform_indices = @transform_3, window_bounds = array<i64: 1, 6, 1>}]} {
    %c0_i32 = arith.constant 0 : i32
    %0 = arith.cmpi eq, %arg1, %c0_i32 : i32
    %1 = arith.extui %0 : i1 to i32
    %c0_i32_0 = arith.constant 0 : i32
    %2 = arith.cmpi ne, %1, %c0_i32_0 : i32
    scf.if %2 {
      %cst_19 = arith.constant 0.000000e+00 : f32
      %16 = vector.broadcast %cst_19 : f32 to vector<1x6x6xf32>
      %c0_20 = arith.constant 0 : index
      %c0_21 = arith.constant 0 : index
      %c0_22 = arith.constant 0 : index
      %17 = vector.load %arg4[%c0_20, %c0_21, %c0_22] : memref<1x6x6xf32, #tpu.memory_space<vmem>>, vector<1x6x6xf32>
      tpu.vector_store %arg4[%c0_20, %c0_21, %c0_22], %16 {strides = array<i32>} : memref<1x6x6xf32, #tpu.memory_space<vmem>>, vector<1x6x6xf32>,
      %cst_23 = arith.constant 0.000000e+00 : f32
      %18 = vector.broadcast %cst_23 : f32 to vector<1x6x1xf32>
      %c0_24 = arith.constant 0 : index
      %c0_25 = arith.constant 0 : index
      %c0_26 = arith.constant 0 : index
      %19 = vector.load %arg5[%c0_24, %c0_25, %c0_26] : memref<1x6x1xf32, #tpu.memory_space<vmem>>, vector<1x6x1xf32>
      tpu.vector_store %arg5[%c0_24, %c0_25, %c0_26], %18 {strides = array<i32>} : memref<1x6x1xf32, #tpu.memory_space<vmem>>, vector<1x6x1xf32>,
    } else {
    }
    %c0 = arith.constant 0 : index
    %c0_1 = arith.constant 0 : index
    %c0_2 = arith.constant 0 : index
    %3 = vector.load %arg2[%c0, %c0_1, %c0_2] : memref<1x6x64xf32, #tpu.memory_space<vmem>>, vector<1x6x64xf32>
    %c0_3 = arith.constant 0 : index
    %c0_4 = arith.constant 0 : index
    %c0_5 = arith.constant 0 : index
    %4 = vector.load %arg3[%c0_3, %c0_4, %c0_5] : memref<1x1x64xf32, #tpu.memory_space<vmem>>, vector<1x1x64xf32>
    %c0_6 = arith.constant 0 : index
    %c0_7 = arith.constant 0 : index
    %c0_8 = arith.constant 0 : index
    %5 = vector.load %arg4[%c0_6, %c0_7, %c0_8] : memref<1x6x6xf32, #tpu.memory_space<vmem>>, vector<1x6x6xf32>
    %cst = arith.constant dense<0.000000e+00> : vector<1x6x6xf32>
    %6 = tpu.matmul %3, %3, %cst {dimension_numbers = #tpu.dot_dimension_numbers<[2], [2], [1], [1], [0, 0, 0, 1, 1, 1], [0], [0]>} : vector<1x6x64xf32>, vector<1x6x64xf32>, vector<1x6x6xf32> -> vector<1x6x6xf32>
    %7 = arith.addf %5, %6 : vector<1x6x6xf32>
    %c0_9 = arith.constant 0 : index
    %c0_10 = arith.constant 0 : index
    %c0_11 = arith.constant 0 : index
    %8 = vector.load %arg4[%c0_9, %c0_10, %c0_11] : memref<1x6x6xf32, #tpu.memory_space<vmem>>, vector<1x6x6xf32>
    tpu.vector_store %arg4[%c0_9, %c0_10, %c0_11], %7 {strides = array<i32>} : memref<1x6x6xf32, #tpu.memory_space<vmem>>, vector<1x6x6xf32>,
    %c0_12 = arith.constant 0 : index
    %c0_13 = arith.constant 0 : index
    %c0_14 = arith.constant 0 : index
    %9 = vector.load %arg5[%c0_12, %c0_13, %c0_14] : memref<1x6x1xf32, #tpu.memory_space<vmem>>, vector<1x6x1xf32>
    %10 = vector.broadcast %4 : vector<1x1x64xf32> to vector<1x6x64xf32>
    %11 = arith.mulf %3, %10 : vector<1x6x64xf32>
    %cst_15 = arith.constant dense<0.000000e+00> : vector<1x6xf32>
    %12 = vector.multi_reduction <add>, %11, %cst_15 [2] : vector<1x6x64xf32> to vector<1x6xf32>
    %13 = vector.shape_cast %12 : vector<1x6xf32> to vector<1x6x1xf32>
    %14 = arith.addf %9, %13 : vector<1x6x1xf32>
    %c0_16 = arith.constant 0 : index
    %c0_17 = arith.constant 0 : index
    %c0_18 = arith.constant 0 : index
    %15 = vector.load %arg5[%c0_16, %c0_17, %c0_18] : memref<1x6x1xf32, #tpu.memory_space<vmem>>, vector<1x6x1xf32>
    tpu.vector_store %arg5[%c0_16, %c0_17, %c0_18], %14 {strides = array<i32>} : memref<1x6x1xf32, #tpu.memory_space<vmem>>, vector<1x6x1xf32>,
    return
  }
  func.func @transform_0(%arg0: i32, %arg1: i32) -> (i32, i32, i32) {
    %c0_i32 = arith.constant 0 : i32
    %c0_i32_0 = arith.constant 0 : i32
    return %arg0, %c0_i32, %arg1 : i32, i32, i32
  }
  func.func @transform_1(%arg0: i32, %arg1: i32) -> (i32, i32, i32) {
    %c0_i32 = arith.constant 0 : i32
    %c0_i32_0 = arith.constant 0 : i32
    return %arg0, %c0_i32, %arg1 : i32, i32, i32
  }
  func.func @transform_2(%arg0: i32, %arg1: i32) -> (i32, i32, i32) {
    %c0_i32 = arith.constant 0 : i32
    %c0_i32_0 = arith.constant 0 : i32
    %c0_i32_1 = arith.constant 0 : i32
    return %arg0, %c0_i32, %c0_i32_0 : i32, i32, i32
  }
  func.func @transform_3(%arg0: i32, %arg1: i32) -> (i32, i32, i32) {
    %c0_i32 = arith.constant 0 : i32
    %c0_i32_0 = arith.constant 0 : i32
    %c0_i32_1 = arith.constant 0 : i32
    return %arg0, %c0_i32, %c0_i32_0 : i32, i32, i32
  }
}

</mosaic_0001>

<llo_original>
// kernel: tpu_custom_call.1
$region0: #{tpu_custom_call.1}
  #allocation0 [shape = 'u32[]', space=smem, size = 0x4, offset = 0x4, fixed_abs, tag = 'smem constant byte address 0x4 - core index']
  #allocation1 [shape = 'u32[144,128]{1,0:T(1,128)}', space=vmem, size = 0x12000, scoped, tag = 'internal scratch']
  %s0 = inlined_call_operand.vmem [shape: f32[2,6,64], index: 0, kind: input, shape index: {}]
  %s1 = inlined_call_operand.vmem [shape: f32[2,1,64], index: 1, kind: input, shape index: {}]
  %s2 = inlined_call_operand.vmem [shape: f32[2,6,6], index: 2, kind: output, shape index: {0}]
  %s3 = inlined_call_operand.vmem [shape: f32[2,6,1], index: 3, kind: output, shape index: {1}]
  %4 = xla_tuple %s2, %s3
  %s5 = sld [smem:[#allocation0]]
  $region53: #{tpu_custom_call.1} parent=0
    _
  %s7 = ssub.s32 1, %s5
  %s8 = scalar_select 0, %s7, %s5
  loop: start=0, step=1, limit=4
  $region2: #{tpu_custom_call.1} parent=0 // loop_pre_header
    _
  $region3: #{tpu_custom_call.1} parent=0 // loop_header
    %s10 = sphi 0, %s14
    %p11 = scmp.ge.s32.totalorder %s10, 4
    %s17 = sphi 0, %s29
    %s18 = sphi 0, %s25
    %s19 = sphi 0, %s17
    %s20 = sphi 0, %s18
    %s21 = sphi 0, %s19
    %s22 = sphi 0, %s20
    %s34 = sphi 0, %s36
    %s37 = sphi 0, %s34
    %s38 = sphi 0, %s37
    %s54 = sphi 0, %s38
    %s62 = sphi 0, %s64
    %s65 = sphi 0, %s62
    %s66 = sphi 0, %s65
    %s82 = sphi 0, %s66
    %s88 = sphi 0, %s90
    %s91 = sphi 0, %s88
    %s92 = sphi 0, %s91
    %s108 = sphi 0, %s92
    %s114 = sphi 0, %s116
    %s117 = sphi 0, %s114
    %s118 = sphi 0, %s117
    %s134 = sphi 0, %s118
  $region4: #{tpu_custom_call.1} parent=0 // loop_header_branch
    %13 = sbr.rel (%p11) target = $region8
  $region5: #{tpu_custom_call.1} parent=0 // loop_body
    %s15 = ssub.s32 %s10, 1
    %s16 = ssub.s32 %s10, 2
    %s23 = sadd.s32 1, %s18
    %p24 = scmp.ge.s32.totalorder %s23, 1
    %s25 = scalar_select %p24, 0, %s23
    %s26 = sadd.s32 1, %s17
    %s27 = scalar_select %p24, %s26, %s17
    %p28 = scmp.ge.s32.totalorder %s27, 2
    %s29 = scalar_select %p28, 0, %s27
    %s30 = ssub.s32 %s17, %s29
    %s31 = ssub.s32 %s18, %s25
    %s32 = sor.u32 %s30, %s31
    %p33 = scmp.eq.s32.totalorder %s32, 0
    %s35 = sadd.s32 %s34, 1
    %s36 = scalar_select %p33, %s34, %s35
    %p39 = pneg %p33
    %p40 = scmp.eq.s32.totalorder %s10, 1
    %p41 = por %p39, %p40
    %p42 = scmp.ne.s32.totalorder %s34, %s37
    %p43 = scmp.eq.s32.totalorder %s10, 0
    %p44 = por %p42, %p43
    %p45 = scmp.ne.s32.totalorder %s34, %s37
    %p46 = scmp.eq.s32.totalorder %s15, 1
    %p47 = por %p45, %p46
    %p48 = scmp.ne.s32.totalorder %s37, %s38
    %p49 = scmp.eq.s32.totalorder %s15, 0
    %p50 = por %p48, %p49
    %p51 = scmp.ne.s32.totalorder %s37, %s38
    %p52 = scmp.eq.s32.totalorder %s16, 1
    %p53 = por %p51, %p52
    %p55 = scmp.ne.s32.totalorder %s38, %s54
    %p56 = scmp.eq.s32.totalorder %s16, 0
    %p57 = por %p55, %p56
    %s58 = ssub.s32 %s17, %s29
    %s59 = ssub.s32 %s18, %s25
    %s60 = sor.u32 %s58, %s59
    %p61 = scmp.eq.s32.totalorder %s60, 0
    %s63 = sadd.s32 %s62, 1
    %s64 = scalar_select %p61, %s62, %s63
    %p67 = pneg %p61
    %p68 = scmp.eq.s32.totalorder %s10, 1
    %p69 = por %p67, %p68
    %p70 = scmp.ne.s32.totalorder %s62, %s65
    %p71 = scmp.eq.s32.totalorder %s10, 0
    %p72 = por %p70, %p71
    %p73 = scmp.ne.s32.totalorder %s62, %s65
    %p74 = scmp.eq.s32.totalorder %s15, 1
    %p75 = por %p73, %p74
    %p76 = scmp.ne.s32.totalorder %s65, %s66
    %p77 = scmp.eq.s32.totalorder %s15, 0
    %p78 = por %p76, %p77
    %p79 = scmp.ne.s32.totalorder %s65, %s66
    %p80 = scmp.eq.s32.totalorder %s16, 1
    %p81 = por %p79, %p80
    %p83 = scmp.ne.s32.totalorder %s66, %s82
    %p84 = scmp.eq.s32.totalorder %s16, 0
    %p85 = por %p83, %p84
    %s86 = ssub.s32 %s17, %s29
    %p87 = scmp.eq.s32.totalorder %s86, 0
    %s89 = sadd.s32 %s88, 1
    %s90 = scalar_select %p87, %s88, %s89
    %p93 = pneg %p87
    %p94 = scmp.eq.s32.totalorder %s10, 1
    %p95 = por %p93, %p94
    %p96 = scmp.ne.s32.totalorder %s88, %s91
    %p97 = scmp.eq.s32.totalorder %s10, 0
    %p98 = por %p96, %p97
    %p99 = scmp.ne.s32.totalorder %s88, %s91
    %p100 = scmp.eq.s32.totalorder %s15, 1
    %p101 = por %p99, %p100
    %p102 = scmp.ne.s32.totalorder %s91, %s92
    %p103 = scmp.eq.s32.totalorder %s15, 0
    %p104 = por %p102, %p103
    %p105 = scmp.ne.s32.totalorder %s91, %s92
    %p106 = scmp.eq.s32.totalorder %s16, 1
    %p107 = por %p105, %p106
    %p109 = scmp.ne.s32.totalorder %s92, %s108
    %p110 = scmp.eq.s32.totalorder %s16, 0
    %p111 = por %p109, %p110
    %s112 = ssub.s32 %s17, %s29
    %p113 = scmp.eq.s32.totalorder %s112, 0
    %s115 = sadd.s32 %s114, 1
    %s116 = scalar_select %p113, %s114, %s115
    %p119 = pneg %p113
    %p120 = scmp.eq.s32.totalorder %s10, 1
    %p121 = por %p119, %p120
    %p122 = scmp.ne.s32.totalorder %s114, %s117
    %p123 = scmp.eq.s32.totalorder %s10, 0
    %p124 = por %p122, %p123
    %p125 = scmp.ne.s32.totalorder %s114, %s117
    %p126 = scmp.eq.s32.totalorder %s15, 1
    %p127 = por %p125, %p126
    %p128 = scmp.ne.s32.totalorder %s117, %s118
    %p129 = scmp.eq.s32.totalorder %s15, 0
    %p130 = por %p128, %p129
    %p131 = scmp.ne.s32.totalorder %s117, %s118
    %p132 = scmp.eq.s32.totalorder %s16, 1
    %p133 = por %p131, %p132
    %p135 = scmp.ne.s32.totalorder %s118, %s134
    %p136 = scmp.eq.s32.totalorder %s16, 0
    %p137 = por %p135, %p136
    %p138 = scmp.le.s32.totalorder 1, %s10
    %p139 = scmp.lt.s32.totalorder %s10, 3
    %p140 = pnand %p138, %p139
    %p141 = pneg %p140
    // Predicated region
    $region9: #{tpu_custom_call.1} parent=5 // pred_check
      _
    $region10: #{tpu_custom_call.1} parent=5 // pred_check_branch
      %143 = sbr.rel (%p140) target = $region12
    $region11: #{tpu_custom_call.1} parent=5 // pred_region
      %s144 = ssub.s32 %s10, 1
    $region12: #{tpu_custom_call.1} parent=5 // pred_fallthru
      _
    %p145 = scmp.lt.s32.totalorder %s10, 2
    // Predicated region
    $region13: #{tpu_custom_call.1} parent=5 // pred_check
      %p146 = pneg %p145
    $region14: #{tpu_custom_call.1} parent=5 // pred_check_branch
      %148 = sbr.rel (%p146) target = $region16
    $region15: #{tpu_custom_call.1} parent=5 // pred_region
      // Predicated region
      $region17: #{tpu_custom_call.1} parent=15 // pred_check
        %p149 = pneg %p44
      $region18: #{tpu_custom_call.1} parent=15 // pred_check_branch
        %151 = sbr.rel (%p149) target = $region20
      $region19: #{tpu_custom_call.1} parent=15 // pred_region
        %p152 = scmp.lt.s32.totalorder %s17, 1
        %s153 = scalar_select %p152, %s17, 1
        %p154 = scmp.lt.s32.totalorder %s18, 0
        %s155 = scalar_select %p154, %s18, 0
        %s156 = sadd.s32 %s155, %s153
        %s157 = smul.addr %s156, 8
        %s158 = scalar_lea.vmem %s0, %s157
      $region20: #{tpu_custom_call.1} parent=15 // pred_fallthru
        _
      // Predicated region
      $region21: #{tpu_custom_call.1} parent=15 // pred_check
        %p159 = pneg %p72
      $region22: #{tpu_custom_call.1} parent=15 // pred_check_branch
        %161 = sbr.rel (%p159) target = $region24
      $region23: #{tpu_custom_call.1} parent=15 // pred_region
        %p162 = scmp.lt.s32.totalorder %s17, 1
        %s163 = scalar_select %p162, %s17, 1
        %p164 = scmp.lt.s32.totalorder %s18, 0
        %s165 = scalar_select %p164, %s18, 0
        %s166 = sadd.s32 %s165, %s163
        %s167 = scalar_lea.vmem %s1, %s166
      $region24: #{tpu_custom_call.1} parent=15 // pred_fallthru
        _
    $region16: #{tpu_custom_call.1} parent=5 // pred_fallthru
      _
    %p168 = scmp.le.s32.totalorder 1, %s10
    %p169 = scmp.lt.s32.totalorder %s10, 3
    %p170 = pnand %p168, %p169
    %p171 = pneg %p170
    // Predicated region
    $region25: #{tpu_custom_call.1} parent=5 // pred_check
      _
    $region26: #{tpu_custom_call.1} parent=5 // pred_check_branch
      %173 = sbr.rel (%p170) target = $region28
    $region27: #{tpu_custom_call.1} parent=5 // pred_region
      %s174 = ssub.s32 %s10, 1
      %p175 = scmp.lt.s32.totalorder %s19, 1
      %s176 = scalar_select %p175, %s19, 1
      %p177 = scmp.lt.s32.totalorder %s20, 0
      %s178 = scalar_select %p177, %s20, 0
      %s179 = sadd.s32 %s178, %s176
      %s180 = smul.addr %s179, 8
      %s181 = scalar_lea.vmem %s0, %s180
      %p182 = pneg %p50
      %p183 = pneg %p47
      %p184 = scmp.lt.s32.totalorder %s19, 1
      %s185 = scalar_select %p184, %s19, 1
      %p186 = scmp.lt.s32.totalorder %s20, 0
      %s187 = scalar_select %p186, %s20, 0
      %s188 = sadd.s32 %s187, %s185
      %s189 = scalar_lea.vmem %s1, %s188
      %p190 = pneg %p78
      %p191 = pneg %p75
      %p192 = pneg %p104
      %p193 = pneg %p101
      %p194 = scmp.lt.s32.totalorder %s19, 1
      %s195 = scalar_select %p194, %s19, 1
      %s196 = smul.addr %s195, 8
      %s197 = scalar_lea.vmem %s2, %s196
      %p198 = pneg %p130
      %p199 = pneg %p127
      %p200 = scmp.lt.s32.totalorder %s19, 1
      %s201 = scalar_select %p200, %s19, 1
      %s202 = smul.addr %s201, 8
      %s203 = scalar_lea.vmem %s3, %s202
      %p204 = scmp.lt.s32.totalorder %s19, 1
      %s205 = scalar_select %p204, %s19, 1
      %p206 = scmp.lt.s32.totalorder %s20, 0
      %s207 = scalar_select %p206, %s20, 0
      %s208 = sadd.s32 %s207, %s205
      %s209 = smul.addr %s208, 8
      %s210 = scalar_lea.vmem %s0, %s209
      %p211 = scmp.lt.s32.totalorder %s19, 1
      %s212 = scalar_select %p211, %s19, 1
      %p213 = scmp.lt.s32.totalorder %s20, 0
      %s214 = scalar_select %p213, %s20, 0
      %s215 = sadd.s32 %s214, %s212
      %s216 = scalar_lea.vmem %s1, %s215
      %p217 = scmp.lt.s32.totalorder %s19, 1
      %s218 = scalar_select %p217, %s19, 1
      %s219 = smul.addr %s218, 8
      %s220 = scalar_lea.vmem %s2, %s219
      %p221 = scmp.lt.s32.totalorder %s19, 1
      %s222 = scalar_select %p221, %s19, 1
      %s223 = smul.addr %s222, 8
      %s224 = scalar_lea.vmem %s3, %s223
      %p225 = scmp.eq.s32.totalorder %s20, 0
      // Predicated region
      $region29: #{tpu_custom_call.1} parent=27 // pred_check
        %p226 = pneg %p225
      $region30: #{tpu_custom_call.1} parent=27 // pred_check_branch
        %228 = sbr.rel (%p226) target = $region32
      $region31: #{tpu_custom_call.1} parent=27 // pred_region
        %vm229 = vcmask 46080
        %230 = vst.msk [vmem:[%s220] sm:$0x3f] %vm229, 0.0
        %vm231 = vcmask 5120
        %232 = vst.msk [vmem:[%s224] sm:$0x3f] %vm231, 0.0
      $region32: #{tpu_custom_call.1} parent=27 // pred_fallthru
        _
      %v233 = vld [vmem:[%s210] sm:$0x3f]
      %v234 = vld [vmem:[%s216] sm:$0x1]
      %v235 = vld [vmem:[%s220] sm:$0x3f]
      %vm236 = vcmask 523264
      %v238 = vsel %vm236, %v233, 0
      %240 = vmatprep.subr.mxu0 0.0
      %241 = vmatpush1.xpose.msra.mxu0 %v238
      %242 = vmatprep.subr.mxu0 0.0
      %243 = vmatpush1.xpose.msra.mxu0 0.0
      %244 = vmatprep.subr.mxu0 0.0
      %245 = vmatpush1.xpose.msra.mxu0 0.0
      %246 = vmatprep.subr.mxu0 0.0
      %247 = vmatpush1.xpose.msra.mxu0 0.0
      %248 = vmatprep.subr.mxu0 0.0
      %249 = vmatpush1.xpose.msra.mxu0 0.0
      %250 = vmatprep.subr.mxu0 0.0
      %251 = vmatpush1.xpose.msra.mxu0 0.0
      %252 = vmatprep.subr.mxu0 0.0
      %253 = vmatpush1.xpose.msra.mxu0 0.0
      %254 = vmatprep.subr.mxu0 0.0
      %255 = vmatpush1.xpose.msra.mxu0 0.0
      %256 = vmatprep.subr.mxu0 0.0
      %257 = vmatpush1.xpose.msra.mxu0 0.0
      %258 = vmatprep.subr.mxu0 0.0
      %259 = vmatpush1.xpose.msra.mxu0 0.0
      %260 = vmatprep.subr.mxu0 0.0
      %261 = vmatpush1.xpose.msra.mxu0 0.0
      %262 = vmatprep.subr.mxu0 0.0
      %263 = vmatpush1.xpose.msra.mxu0 0.0
      %264 = vmatprep.subr.mxu0 0.0
      %265 = vmatpush1.xpose.msra.mxu0 0.0
      %266 = vmatprep.subr.mxu0 0.0
      %267 = vmatpush1.xpose.msra.mxu0 0.0
      %268 = vmatprep.subr.mxu0 0.0
      %269 = vmatpush1.xpose.msra.mxu0 0.0
      %270 = vmatprep.subr.mxu0 0.0
      %271 = vmatpush1.xpose.msra.mxu0 0.0
      %272 = vmatprep.subr.mxu0 0.0
      %273 = vmatpush1.xpose.msra.mxu0 0.0
      %274 = vmatprep.subr.mxu0 0.0
      %275 = vmatpush1.xpose.msra.mxu0 0.0
      %276 = vmatprep.subr.mxu0 0.0
      %277 = vmatpush1.xpose.msra.mxu0 0.0
      %278 = vmatprep.subr.mxu0 0.0
      %279 = vmatpush1.xpose.msra.mxu0 0.0
      %280 = vmatprep.subr.mxu0 0.0
      %281 = vmatpush1.xpose.msra.mxu0 0.0
      %282 = vmatprep.subr.mxu0 0.0
      %283 = vmatpush1.xpose.msra.mxu0 0.0
      %284 = vmatprep.subr.mxu0 0.0
      %285 = vmatpush1.xpose.msra.mxu0 0.0
      %286 = vmatprep.subr.mxu0 0.0
      %287 = vmatpush1.xpose.msra.mxu0 0.0
      %288 = vmatprep.subr.mxu0 0.0
      %289 = vmatpush1.xpose.msra.mxu0 0.0
      %290 = vmatprep.subr.mxu0 0.0
      %291 = vmatpush1.xpose.msra.mxu0 0.0
      %292 = vmatprep.subr.mxu0 0.0
      %293 = vmatpush1.xpose.msra.mxu0 0.0
      %294 = vmatprep.subr.mxu0 0.0
      %295 = vmatpush1.xpose.msra.mxu0 0.0
      %296 = vmatprep.subr.mxu0 0.0
      %297 = vmatpush1.xpose.msra.mxu0 0.0
      %298 = vmatprep.subr.mxu0 0.0
      %299 = vmatpush1.xpose.msra.mxu0 0.0
      %300 = vmatprep.subr.mxu0 0.0
      %301 = vmatpush1.xpose.msra.mxu0 0.0
      %302 = vmatprep.subr.mxu0 0.0
      %303 = vmatpush1.xpose.msra.mxu0 0.0
      %304 = vmatprep.mubr.f32.mxu0 0.0
      %305 = vmatmul.mubr.f32.gmra.mrb[0].mxu0 %v238
      %v306 = vpop.f32.mrb[0].mxu0
      %v307 = vadd.f32 0.0, %v306
      %v308 = vpop.f32.mrb[0].mxu0
      %309 = vdwg.mxu0
      %v310 = vadd.f32 %v235, %v307
      %vm311 = vcmask 46080
      %312 = vst.msk [vmem:[%s220] sm:$0x3f] %vm311, %v310
      %v313 = vld [vmem:[%s224] sm:$0x3f]
      %v315 = vlaneseq
      %v316 = vshrl.u32 %v315, 7
      %v317 = vsub.s32 0, %v316
      %v318 = vrot.slane %v234, %v317
      %v320 = vmul.f32 %v233, %v318
      %vm321 = vcmask 521216
      %v322 = vsel %vm321, %v320, 0.0
      %323 = vadd.xlane.f32.xlu0 %v322
      %v324 = vpop.xlane.xlu0 %323
      %v325 = vadd.f32 %v313, %v324
      %vm326 = vcmask 5120
      %327 = vst.msk [vmem:[%s224] sm:$0x3f] %vm326, %v325
      %p328 = scmp.lt.s32.totalorder %s19, 1
      %s329 = scalar_select %p328, %s19, 1
      %s330 = smul.addr %s329, 8
      %s331 = scalar_lea.vmem %s2, %s330
      %p332 = scmp.lt.s32.totalorder %s19, 1
      %s333 = scalar_select %p332, %s19, 1
      %s334 = smul.addr %s333, 8
      %s335 = scalar_lea.vmem %s3, %s334
      // Predicated region
      $region33: #{tpu_custom_call.1} parent=27 // pred_check
        %p336 = pneg %p101
      $region34: #{tpu_custom_call.1} parent=27 // pred_check_branch
        %338 = sbr.rel (%p336) target = $region36
      $region35: #{tpu_custom_call.1} parent=27 // pred_region
        _
      $region36: #{tpu_custom_call.1} parent=27 // pred_fallthru
        _
      // Predicated region
      $region37: #{tpu_custom_call.1} parent=27 // pred_check
        %p339 = pneg %p127
      $region38: #{tpu_custom_call.1} parent=27 // pred_check_branch
        %341 = sbr.rel (%p339) target = $region40
      $region39: #{tpu_custom_call.1} parent=27 // pred_region
        _
      $region40: #{tpu_custom_call.1} parent=27 // pred_fallthru
        _
    $region28: #{tpu_custom_call.1} parent=5 // pred_fallthru
      _
    %p342 = scmp.le.s32.totalorder 2, %s10
    // Predicated region
    $region41: #{tpu_custom_call.1} parent=5 // pred_check
      %p343 = pneg %p342
    $region42: #{tpu_custom_call.1} parent=5 // pred_check_branch
      %345 = sbr.rel (%p343) target = $region44
    $region43: #{tpu_custom_call.1} parent=5 // pred_region
      %s346 = ssub.s32 %s10, 2
      // Predicated region
      $region45: #{tpu_custom_call.1} parent=43 // pred_check
        %p347 = pneg %p107
      $region46: #{tpu_custom_call.1} parent=43 // pred_check_branch
        %349 = sbr.rel (%p347) target = $region48
      $region47: #{tpu_custom_call.1} parent=43 // pred_region
        %p350 = scmp.lt.s32.totalorder %s21, 1
        %s351 = scalar_select %p350, %s21, 1
        %s352 = smul.addr %s351, 8
        %s353 = scalar_lea.vmem %s2, %s352
      $region48: #{tpu_custom_call.1} parent=43 // pred_fallthru
        _
      // Predicated region
      $region49: #{tpu_custom_call.1} parent=43 // pred_check
        %p354 = pneg %p133
      $region50: #{tpu_custom_call.1} parent=43 // pred_check_branch
        %356 = sbr.rel (%p354) target = $region52
      $region51: #{tpu_custom_call.1} parent=43 // pred_region
        %p357 = scmp.lt.s32.totalorder %s21, 1
        %s358 = scalar_select %p357, %s21, 1
        %s359 = smul.addr %s358, 8
        %s360 = scalar_lea.vmem %s3, %s359
      $region52: #{tpu_custom_call.1} parent=43 // pred_fallthru
        _
    $region44: #{tpu_custom_call.1} parent=5 // pred_fallthru
      _
  $region6: #{tpu_custom_call.1} parent=0 // loop_footer
    %s14 = sadd.s32 1, %s10
  $region7: #{tpu_custom_call.1} parent=0 // loop_footer_branch
    %9 = sbr.rel target = $region3
  $region8: #{tpu_custom_call.1} parent=0 // loop_exit
    _

</llo_original>
